<compile_context>
chip_gen: v6e
topology: v6e:2x2x1
jax: 0.10.0
libtpu: 0.0.40
codegen_flags: <defaults>
</compile_context>

<pallas_src>
import jax
import jax.numpy as jnp
from jax.experimental import pallas as pl
from jax.experimental.pallas import tpu as pltpu

HIDDEN = 512          # hidden width of the MLP (fixed by the PyTorch module)
MAX_TILE_M = 1024     # rows per grid step (multiple of 8, ~1.5 MiB of tiles)
LANE = 128            # TPU lane width for lane-dense output padding


def _round_up(x: int, m: int) -> int:
    return ((x + m - 1) // m) * m


def _mlp_kernel(x_ref, w1_ref, b1_ref, w2_ref, b2_ref, o_ref):
    # x_ref : (TILE_M, D_in)        bf16
    # w1_ref: (D_in, HIDDEN)        bf16  (resident across grid steps)
    # b1_ref: (1, HIDDEN)           f32
    # w2_ref: (HIDDEN, D_out_pad)   bf16  (resident, lane-padded)
    # b2_ref: (1, D_out_pad)        f32
    # o_ref : (TILE_M, D_out_pad)   f32
    x = x_ref[...]
    h = jnp.dot(x, w1_ref[...], preferred_element_type=jnp.float32)
    h = jnp.maximum(h + b1_ref[...], 0.0)                      # f32 bias + ReLU
    y = jnp.dot(h.astype(jnp.bfloat16), w2_ref[...],
                preferred_element_type=jnp.float32)
    o_ref[...] = (y + b2_ref[...]).astype(o_ref.dtype)


def mlp_forward(x, w1, b1, w2, b2):
    """x: (..., input_size) -> (..., target_size). Params stored (in, out)."""
    d_in = x.shape[-1]
    d_out = w2.shape[1]
    lead = x.shape[:-1]

    # ---- flatten rows and pad M to a whole number of tiles -----------------
    xm = x.reshape(-1, d_in)
    m = xm.shape[0]
    tile_m = min(MAX_TILE_M, _round_up(m, 8))
    m_pad = _round_up(m, tile_m)
    if m_pad != m:
        xm = jnp.pad(xm, ((0, m_pad - m), (0, 0)))

    # ---- lane-dense output: pad target dim to a multiple of 128 ------------
    d_out_pad = _round_up(d_out, LANE)
    if d_out_pad != d_out:
        w2 = jnp.pad(w2, ((0, 0), (0, d_out_pad - d_out)))
        b2 = jnp.pad(b2, ((0, 0), (0, d_out_pad - d_out)))

    # ---- dtype prep: bf16 operands into the MXU, f32 biases -----------------
    xm_b = xm.astype(jnp.bfloat16)
    w1_b = w1.astype(jnp.bfloat16)
    w2_b = w2.astype(jnp.bfloat16)
    b1_f = b1.astype(jnp.float32)
    b2_f = b2.astype(jnp.float32)

    grid = (pl.cdiv(m_pad, tile_m),)

    out = pl.pallas_call(
        _mlp_kernel,
        out_shape=jax.ShapeDtypeStruct((m_pad, d_out_pad), jnp.float32),
        grid=grid,
        in_specs=[
            pl.BlockSpec((tile_m, d_in), lambda i: (i, 0)),        # x streams
            pl.BlockSpec((d_in, HIDDEN), lambda i: (0, 0)),        # w1 resident
            pl.BlockSpec((1, HIDDEN), lambda i: (0, 0)),           # b1 resident
            pl.BlockSpec((HIDDEN, d_out_pad), lambda i: (0, 0)),   # w2 resident
            pl.BlockSpec((1, d_out_pad), lambda i: (0, 0)),        # b2 resident
        ],
        out_specs=pl.BlockSpec((tile_m, d_out_pad), lambda i: (i, 0)),
        compiler_params=pltpu.CompilerParams(
            dimension_semantics=("parallel",)),
    )(xm_b, w1_b, b1_f, w2_b, b2_f)

    return out[:m, :d_out].reshape(*lead, d_out)


def init_params(key, input_size, target_size):
    """Deterministic params matching nn.Linear init (uniform +-1/sqrt(fan_in))."""
    k1, k2, k3, k4 = jax.random.split(key, 4)
    lim1 = 1.0 / jnp.sqrt(input_size)
    lim2 = 1.0 / jnp.sqrt(HIDDEN)
    # stored as (in, out) so the kernel can do x @ W directly
    w1 = jax.random.uniform(k1, (input_size, HIDDEN), jnp.float32, -lim1, lim1)
    b1 = jax.random.uniform(k2, (1, HIDDEN), jnp.float32, -lim1, lim1)
    w2 = jax.random.uniform(k3, (HIDDEN, target_size), jnp.float32, -lim2, lim2)
    b2 = jax.random.uniform(k4, (1, target_size), jnp.float32, -lim2, lim2)
    return w1, b1, w2, b2


def _reference(x, w1, b1, w2, b2):
    """Same-precision JAX reference (bf16 operands, f32 accumulation)."""
    d_in = x.shape[-1]
    xm = x.reshape(-1, d_in).astype(jnp.bfloat16)
    h = jnp.dot(xm, w1.astype(jnp.bfloat16),
                preferred_element_type=jnp.float32) + b1
    h = jnp.maximum(h, 0.0)
    y = jnp.dot(h.astype(jnp.bfloat16), w2.astype(jnp.bfloat16),
                preferred_element_type=jnp.float32) + b2
    return y.reshape(*x.shape[:-1], w2.shape[1])


if __name__ == "__main__":
    input_size = 8     # univariate window length fed to the first Linear
    target_size = 8    # forecast horizon
    batch, channels = 2, 1  # forward receives x permuted to (B, 1, input_size)

    key = jax.random.PRNGKey(0)
    kx, kp, kx2 = jax.random.split(key, 3)
    w1, b1, w2, b2 = init_params(kp, input_size, target_size)

    # --- tiny case (matches the PyTorch usage shape) -------------------------
    x = jax.random.normal(kx, (batch, channels, input_size), jnp.float32)
    y = mlp_forward(x, w1, b1, w2, b2)
    jax.block_until_ready(y)
    y_ref = _reference(x, w1, b1, w2, b2)
    assert y.shape == (batch, channels, target_size)
    assert jnp.allclose(y, y_ref, atol=1e-3, rtol=1e-3)

    # --- larger batch: exercises the M-grid + partial-tile padding path ------
    x2 = jax.random.normal(kx2, (300, channels, input_size), jnp.float32)
    y2 = mlp_forward(x2, w1, b1, w2, b2)
    jax.block_until_ready(y2)
    y2_ref = _reference(x2, w1, b1, w2, b2)
    assert y2.shape == (300, channels, target_size)
    assert jnp.allclose(y2, y2_ref, atol=1e-3, rtol=1e-3)

    print("KERNEL_OK")
</pallas_src>

<mosaic_0001>
module attributes {stable_mosaic.version = 11 : i64} {
  func.func @_mlp_kernel(%arg0: i32, %arg1: memref<8x8xbf16, #tpu.memory_space<vmem>>, %arg2: memref<8x512xbf16, #tpu.memory_space<vmem>>, %arg3: memref<1x512xf32, #tpu.memory_space<vmem>>, %arg4: memref<512x128xbf16, #tpu.memory_space<vmem>>, %arg5: memref<1x128xf32, #tpu.memory_space<vmem>>, %arg6: memref<8x128xf32, #tpu.memory_space<vmem>>) attributes {dimension_semantics = [#tpu.dimension_semantics<parallel>], iteration_bounds = array<i64: 1>, scalar_prefetch = 0 : i64, scratch_operands = 0 : i64, tpu.core_type = #tpu.core_type<tc>, window_params = [{transform_indices = @transform_0, window_bounds = array<i64: 8, 8>}, {pipeline_mode = #tpu.pipeline_mode<synchronous>, transform_indices = @transform_1, window_bounds = array<i64: 8, 512>}, {pipeline_mode = #tpu.pipeline_mode<synchronous>, transform_indices = @transform_2, window_bounds = array<i64: 1, 512>}, {pipeline_mode = #tpu.pipeline_mode<synchronous>, transform_indices = @transform_3, window_bounds = array<i64: 512, 128>}, {pipeline_mode = #tpu.pipeline_mode<synchronous>, transform_indices = @transform_4, window_bounds = array<i64: 1, 128>}, {transform_indices = @transform_5, window_bounds = array<i64: 8, 128>}]} {
    %c0 = arith.constant 0 : index
    %c0_0 = arith.constant 0 : index
    %0 = vector.load %arg1[%c0, %c0_0] : memref<8x8xbf16, #tpu.memory_space<vmem>>, vector<8x8xbf16>
    %c0_1 = arith.constant 0 : index
    %c0_2 = arith.constant 0 : index
    %1 = vector.load %arg2[%c0_1, %c0_2] : memref<8x512xbf16, #tpu.memory_space<vmem>>, vector<8x512xbf16>
    %cst = arith.constant dense<0.000000e+00> : vector<8x512xf32>
    %2 = tpu.matmul %0, %1, %cst {dimension_numbers = #tpu.dot_dimension_numbers<[1], [0], [0], [1], [0, 0, 1, 1], [], []>} : vector<8x8xbf16>, vector<8x512xbf16>, vector<8x512xf32> -> vector<8x512xf32>
    %c0_3 = arith.constant 0 : index
    %c0_4 = arith.constant 0 : index
    %3 = vector.load %arg3[%c0_3, %c0_4] : memref<1x512xf32, #tpu.memory_space<vmem>>, vector<1x512xf32>
    %4 = vector.broadcast %3 : vector<1x512xf32> to vector<8x512xf32>
    %5 = arith.addf %2, %4 : vector<8x512xf32>
    %cst_5 = arith.constant 0.000000e+00 : f32
    %6 = vector.broadcast %cst_5 : f32 to vector<8x512xf32>
    %7 = arith.maximumf %5, %6 : vector<8x512xf32>
    %8 = arith.truncf %7 : vector<8x512xf32> to vector<8x512xbf16>
    %c0_6 = arith.constant 0 : index
    %c0_7 = arith.constant 0 : index
    %9 = vector.load %arg4[%c0_6, %c0_7] : memref<512x128xbf16, #tpu.memory_space<vmem>>, vector<512x128xbf16>
    %cst_8 = arith.constant dense<0.000000e+00> : vector<8x128xf32>
    %10 = tpu.matmul %8, %9, %cst_8 {dimension_numbers = #tpu.dot_dimension_numbers<[1], [0], [0], [1], [0, 0, 1, 1], [], []>} : vector<8x512xbf16>, vector<512x128xbf16>, vector<8x128xf32> -> vector<8x128xf32>
    %c0_9 = arith.constant 0 : index
    %c0_10 = arith.constant 0 : index
    %11 = vector.load %arg5[%c0_9, %c0_10] : memref<1x128xf32, #tpu.memory_space<vmem>>, vector<1x128xf32>
    %12 = vector.broadcast %11 : vector<1x128xf32> to vector<8x128xf32>
    %13 = arith.addf %10, %12 : vector<8x128xf32>
    %c0_11 = arith.constant 0 : index
    %c0_12 = arith.constant 0 : index
    %14 = vector.load %arg6[%c0_11, %c0_12] : memref<8x128xf32, #tpu.memory_space<vmem>>, vector<8x128xf32>
    tpu.vector_store %arg6[%c0_11, %c0_12], %13 {strides = array<i32>} : memref<8x128xf32, #tpu.memory_space<vmem>>, vector<8x128xf32>,
    return
  }
  func.func @transform_0(%arg0: i32) -> (i32, i32) {
    %c0_i32 = arith.constant 0 : i32
    %c0_i32_0 = arith.constant 0 : i32
    return %arg0, %c0_i32 : i32, i32
  }
  func.func @transform_1(%arg0: i32) -> (i32, i32) {
    %c0_i32 = arith.constant 0 : i32
    %c0_i32_0 = arith.constant 0 : i32
    %c0_i32_1 = arith.constant 0 : i32
    return %c0_i32, %c0_i32_0 : i32, i32
  }
  func.func @transform_2(%arg0: i32) -> (i32, i32) {
    %c0_i32 = arith.constant 0 : i32
    %c0_i32_0 = arith.constant 0 : i32
    %c0_i32_1 = arith.constant 0 : i32
    return %c0_i32, %c0_i32_0 : i32, i32
  }
  func.func @transform_3(%arg0: i32) -> (i32, i32) {
    %c0_i32 = arith.constant 0 : i32
    %c0_i32_0 = arith.constant 0 : i32
    %c0_i32_1 = arith.constant 0 : i32
    return %c0_i32, %c0_i32_0 : i32, i32
  }
  func.func @transform_4(%arg0: i32) -> (i32, i32) {
    %c0_i32 = arith.constant 0 : i32
    %c0_i32_0 = arith.constant 0 : i32
    %c0_i32_1 = arith.constant 0 : i32
    return %c0_i32, %c0_i32_0 : i32, i32
  }
  func.func @transform_5(%arg0: i32) -> (i32, i32) {
    %c0_i32 = arith.constant 0 : i32
    %c0_i32_0 = arith.constant 0 : i32
    return %arg0, %c0_i32 : i32, i32
  }
}

</mosaic_0001>

<llo_original>
// kernel: tpu_custom_call.1
$region0: #{tpu_custom_call.1}
  #allocation0 [shape = 'u32[]', space=smem, size = 0x4, offset = 0x4, fixed_abs, tag = 'smem constant byte address 0x4 - core index']
  #allocation1 [shape = 'u32[144,128]{1,0:T(1,128)}', space=vmem, size = 0x12000, scoped, tag = 'internal scratch']
  %s0 = inlined_call_operand.hbm [shape: bf16[8,8], index: 0, kind: input, shape index: {}]
  %s1 = inlined_call_operand.hbm [shape: bf16[8,512], index: 1, kind: input, shape index: {}]
  %s2 = inlined_call_operand.hbm [shape: f32[1,512], index: 2, kind: input, shape index: {}]
  %s3 = inlined_call_operand.hbm [shape: bf16[512,128], index: 3, kind: input, shape index: {}]
  %s4 = inlined_call_operand.vmem [shape: f32[1,128], index: 4, kind: input, shape index: {}]
  %s5 = inlined_call_operand.hbm [shape: f32[8,128], index: 5, kind: output, shape index: {}]
  %s6 = sld [smem:[#allocation0]]
  $region46: #{tpu_custom_call.1} parent=0
    _
  %s8 = ssub.s32 1, %s6
  %s9 = scalar_select 0, %s8, %s6
  $region1: #{tpu_custom_call.1} parent=0
    #allocation2 [shape = 'u8[2048]{0}', space=vmem, size = 0x800, scoped, tag = 'input window, operand 0, single buffered']
    #allocation3 [shape = 's32[1]{0}', space=sflag, size = 0x4, scoped, tag = 'scoped memory for tpu_custom_call.1']
    #allocation4 [shape = 's32[1]{0}', space=sflag, size = 0x4, scoped, tag = 'scoped memory for tpu_custom_call.1']
    #allocation5 [shape = 'u8[8192]{0}', space=vmem, size = 0x2000, scoped, tag = 'input window, operand 1, single buffered']
    #allocation6 [shape = 's32[1]{0}', space=sflag, size = 0x4, scoped, tag = 'scoped memory for tpu_custom_call.1']
    #allocation7 [shape = 'u8[2048]{0}', space=vmem, size = 0x800, scoped, tag = 'input window, operand 2, single buffered']
    #allocation8 [shape = 'u8[131072]{0}', space=vmem, size = 0x20000, scoped, tag = 'input window, operand 3, single buffered']
    #allocation9 [shape = 's32[1]{0}', space=sflag, size = 0x4, scoped, tag = 'scoped memory for tpu_custom_call.1']
    #allocation10 [shape = 'u8[4096]{0}', space=vmem, size = 0x1000, scoped, tag = 'output window, operand 0, single buffered']
    %10 = vsyncpa [#allocation3], 0
    %11 = vsyncpa [#allocation6], 0
    %12 = vsyncpa [#allocation9], 0
    %13 = vsyncpa [#allocation4], 0
    // Predicated region
    $region2: #{tpu_custom_call.1} parent=1 // pred_check
      _
    $region3: #{tpu_custom_call.1} parent=1 // pred_check_branch
      %15 = sbr.rel (0) target = $region5
    $region4: #{tpu_custom_call.1} parent=1 // pred_region
      %s17 = ssub.s32 64, 64
      %18 = vsyncadd [#allocation3], %s17
      %s20 = sshll.u32 [#allocation2], 4
      %s21 = int_to_ptr.vmem [resolvable:$true] %s20
      %23 = dma.hbm_to_vmem [thread:$0]  %s0, 64, %s21, [#allocation3]
    $region5: #{tpu_custom_call.1} parent=1 // pred_fallthru
      _
    // Predicated region
    $region6: #{tpu_custom_call.1} parent=1 // pred_check
      _
    $region7: #{tpu_custom_call.1} parent=1 // pred_check_branch
      %25 = sbr.rel (0) target = $region9
    $region8: #{tpu_custom_call.1} parent=1 // pred_region
      %s27 = ssub.s32 256, 256
      %28 = vsyncadd [#allocation6], %s27
      %s30 = sshll.u32 [#allocation5], 4
      %s31 = int_to_ptr.vmem [resolvable:$true] %s30
      %33 = dma.hbm_to_vmem [thread:$0]  %s1, 256, %s31, [#allocation6]
    $region9: #{tpu_custom_call.1} parent=1 // pred_fallthru
      _
    // Predicated region
    $region10: #{tpu_custom_call.1} parent=1 // pred_check
      _
    $region11: #{tpu_custom_call.1} parent=1 // pred_check_branch
      %35 = sbr.rel (0) target = $region13
    $region12: #{tpu_custom_call.1} parent=1 // pred_region
      %s37 = ssub.s32 64, 64
      %38 = vsyncadd [#allocation6], %s37
      %s40 = sshll.u32 [#allocation7], 4
      %s41 = int_to_ptr.vmem [resolvable:$true] %s40
      %43 = dma.hbm_to_vmem [thread:$0]  %s2, 64, %s41, [#allocation6]
    $region13: #{tpu_custom_call.1} parent=1 // pred_fallthru
      _
    // Predicated region
    $region14: #{tpu_custom_call.1} parent=1 // pred_check
      _
    $region15: #{tpu_custom_call.1} parent=1 // pred_check_branch
      %45 = sbr.rel (0) target = $region17
    $region16: #{tpu_custom_call.1} parent=1 // pred_region
      %s47 = ssub.s32 4096, 4096
      %48 = vsyncadd [#allocation9], %s47
      %s49 = sshll.u32 [#allocation8], 4
      %s50 = int_to_ptr.vmem [resolvable:$true] %s49
      %55 = dma.hbm_to_vmem [thread:$0]  %s3, 4096, %s50, [#allocation9], 64, 64, 4
    $region17: #{tpu_custom_call.1} parent=1 // pred_fallthru
      _
    // Predicated region
    $region18: #{tpu_custom_call.1} parent=1 // pred_check
      _
    $region19: #{tpu_custom_call.1} parent=1 // pred_check_branch
      %57 = sbr.rel (0) target = $region21
    $region20: #{tpu_custom_call.1} parent=1 // pred_region
      _
    $region21: #{tpu_custom_call.1} parent=1 // pred_fallthru
      _
    // Predicated region
    $region22: #{tpu_custom_call.1} parent=1 // pred_check
      _
    $region23: #{tpu_custom_call.1} parent=1 // pred_check_branch
      %59 = sbr.rel (0) target = $region25
    $region24: #{tpu_custom_call.1} parent=1 // pred_region
      %60 = dma.done [#allocation3], 64
    $region25: #{tpu_custom_call.1} parent=1 // pred_fallthru
      _
    // Predicated region
    $region26: #{tpu_custom_call.1} parent=1 // pred_check
      _
    $region27: #{tpu_custom_call.1} parent=1 // pred_check_branch
      %62 = sbr.rel (0) target = $region29
    $region28: #{tpu_custom_call.1} parent=1 // pred_region
      %63 = dma.done [#allocation6], 256
    $region29: #{tpu_custom_call.1} parent=1 // pred_fallthru
      _
    // Predicated region
    $region30: #{tpu_custom_call.1} parent=1 // pred_check
      _
    $region31: #{tpu_custom_call.1} parent=1 // pred_check_branch
      %65 = sbr.rel (0) target = $region33
    $region32: #{tpu_custom_call.1} parent=1 // pred_region
      %66 = dma.done [#allocation6], 64
    $region33: #{tpu_custom_call.1} parent=1 // pred_fallthru
      _
    // Predicated region
    $region34: #{tpu_custom_call.1} parent=1 // pred_check
      _
    $region35: #{tpu_custom_call.1} parent=1 // pred_check_branch
      %68 = sbr.rel (0) target = $region37
    $region36: #{tpu_custom_call.1} parent=1 // pred_region
      %69 = dma.done [#allocation9], 4096
    $region37: #{tpu_custom_call.1} parent=1 // pred_fallthru
      _
    %v71 = vld [vmem:[#allocation2] sm:$0xf]
    %v72 = vld [vmem:[#allocation5] sm:$0xff]
    %v73 = vld [vmem:[#allocation5 + $0x8] sm:$0xff]
    %v74 = vld [vmem:[#allocation7] sm:$0xf]
    %v76 = vlaneseq
    %v77 = vshrl.u32 %v76, 7
    %v78 = vsub.s32 0, %v77
    %v79 = vrot.slane %v74, %v78
    %v80 = vlaneseq
    %v81 = vshrl.u32 %v80, 7
    %v82 = vsub.s32 1, %v81
    %v83 = vrot.slane %v74, %v82
    %v84 = vlaneseq
    %v85 = vshrl.u32 %v84, 7
    %v86 = vsub.s32 2, %v85
    %v87 = vrot.slane %v74, %v86
    %v88 = vlaneseq
    %v89 = vshrl.u32 %v88, 7
    %v90 = vsub.s32 3, %v89
    %v91 = vrot.slane %v74, %v90
    %v98 = vunpack.c.l.b16 %v72
    %v99 = vunpack.c.h.b16 %v72
    %v100 = vunpack.c.l.b16 %v73
    %v101 = vunpack.c.h.b16 %v73
    %v102 = vpack.c.b16 %v98, %v98
    %v103 = vpack.c.b16 %v99, %v99
    %v104 = vpack.c.b16 %v100, %v100
    %v105 = vpack.c.b16 %v101, %v101
    %vm106 = vcmask 64512
    %v108 = vsel %vm106, %v71, 0
    %vm110 = vcmask 1043456
    %v112 = vsel %vm110, %v102, 0
    %v115 = vsel %vm110, %v103, 0
    %v118 = vsel %vm110, %v104, 0
    %v121 = vsel %vm110, %v105, 0
    %123 = vmatprep.subr.bf16.mxu0 0
    %124 = vmatpush1.bf16.msra.mxu0 0
    %125 = vmatprep.subr.bf16.mxu0 0
    %126 = vmatpush1.bf16.msra.mxu0 0
    %127 = vmatprep.subr.bf16.mxu0 0
    %128 = vmatpush1.bf16.msra.mxu0 0
    %129 = vmatprep.subr.bf16.mxu0 0
    %130 = vmatpush1.bf16.msra.mxu0 0
    %131 = vmatprep.subr.bf16.mxu0 0
    %132 = vmatpush1.bf16.msra.mxu0 0
    %133 = vmatprep.subr.bf16.mxu0 0
    %134 = vmatpush1.bf16.msra.mxu0 0
    %135 = vmatprep.subr.bf16.mxu0 0
    %136 = vmatpush1.bf16.msra.mxu0 0
    %137 = vmatprep.subr.bf16.mxu0 %v115
    %138 = vmatpush1.bf16.msra.mxu0 %v112
    %139 = vmatprep.subr.bf16.mxu0 0
    %140 = vmatpush2.bf16.msra.mxu0 0
    %141 = vmatprep.subr.bf16.mxu0 0
    %142 = vmatpush2.bf16.msra.mxu0 0
    %143 = vmatprep.subr.bf16.mxu0 0
    %144 = vmatpush2.bf16.msra.mxu0 0
    %145 = vmatprep.subr.bf16.mxu0 0
    %146 = vmatpush2.bf16.msra.mxu0 0
    %147 = vmatprep.subr.bf16.mxu0 0
    %148 = vmatpush2.bf16.msra.mxu0 0
    %149 = vmatprep.subr.bf16.mxu0 0
    %150 = vmatpush2.bf16.msra.mxu0 0
    %151 = vmatprep.subr.bf16.mxu0 0
    %152 = vmatpush2.bf16.msra.mxu0 0
    %153 = vmatprep.subr.bf16.mxu0 0
    %154 = vmatpush2.bf16.msra.mxu0 0
    %155 = vmatprep.mubr.bf16.mxu0 0
    %156 = vmatmul.mubr.bf16.gmra.mxu0 %v108
    %v157 = vpop.f32.mrf.mxu0
    %v158 = vadd.f32 %v79, %v157
    %v159 = vpop.f32.mrf.mxu0
    %v160 = vadd.f32 %v83, %v159
    %v161 = vpop.f32.mrf.mxu0
    %v162 = vpop.f32.mrf.mxu0
    %163 = vdwg.mxu0
    %164 = vmatprep.subr.bf16.mxu0 0
    %165 = vmatpush1.bf16.msra.mxu0 0
    %166 = vmatprep.subr.bf16.mxu0 0
    %167 = vmatpush1.bf16.msra.mxu0 0
    %168 = vmatprep.subr.bf16.mxu0 0
    %169 = vmatpush1.bf16.msra.mxu0 0
    %170 = vmatprep.subr.bf16.mxu0 0
    %171 = vmatpush1.bf16.msra.mxu0 0
    %172 = vmatprep.subr.bf16.mxu0 0
    %173 = vmatpush1.bf16.msra.mxu0 0
    %174 = vmatprep.subr.bf16.mxu0 0
    %175 = vmatpush1.bf16.msra.mxu0 0
    %176 = vmatprep.subr.bf16.mxu0 0
    %177 = vmatpush1.bf16.msra.mxu0 0
    %178 = vmatprep.subr.bf16.mxu0 %v121
    %179 = vmatpush1.bf16.msra.mxu0 %v118
    %180 = vmatprep.subr.bf16.mxu0 0
    %181 = vmatpush2.bf16.msra.mxu0 0
    %182 = vmatprep.subr.bf16.mxu0 0
    %183 = vmatpush2.bf16.msra.mxu0 0
    %184 = vmatprep.subr.bf16.mxu0 0
    %185 = vmatpush2.bf16.msra.mxu0 0
    %186 = vmatprep.subr.bf16.mxu0 0
    %187 = vmatpush2.bf16.msra.mxu0 0
    %188 = vmatprep.subr.bf16.mxu0 0
    %189 = vmatpush2.bf16.msra.mxu0 0
    %190 = vmatprep.subr.bf16.mxu0 0
    %191 = vmatpush2.bf16.msra.mxu0 0
    %192 = vmatprep.subr.bf16.mxu0 0
    %193 = vmatpush2.bf16.msra.mxu0 0
    %194 = vmatprep.subr.bf16.mxu0 0
    %195 = vmatpush2.bf16.msra.mxu0 0
    %196 = vmatprep.mubr.bf16.mxu0 0
    %197 = vmatmul.mubr.bf16.gmra.mxu0 %v108
    %v198 = vpop.f32.mrf.mxu0
    %v199 = vadd.f32 %v87, %v198
    %v200 = vpop.f32.mrf.mxu0
    %v201 = vadd.f32 %v91, %v200
    %v202 = vpop.f32.mrf.mxu0
    %v203 = vpop.f32.mrf.mxu0
    %204 = vdwg.mxu0
    %v205 = vmax.f32 %v158, 0.0
    %v206 = vmax.f32 %v160, 0.0
    %v207 = vmax.f32 %v199, 0.0
    %v208 = vmax.f32 %v201, 0.0
    %v209 = vpack.c.bf16 %v205, %v205
    %v210 = vpack.c.bf16 %v206, %v206
    %v211 = vpack.c.bf16 %v207, %v207
    %v212 = vpack.c.bf16 %v208, %v208
    %v213 = vld [vmem:[#allocation8] sm:$0xf]
    %v214 = vld [vmem:[#allocation8 + $0x4] sm:$0xf]
    %v215 = vld [vmem:[#allocation8 + $0x8] sm:$0xf]
    %v216 = vld [vmem:[#allocation8 + $0xc] sm:$0xf]
    %v217 = vld [vmem:[#allocation8 + $0x10] sm:$0xf]
    %v218 = vld [vmem:[#allocation8 + $0x14] sm:$0xf]
    %v219 = vld [vmem:[#allocation8 + $0x18] sm:$0xf]
    %v220 = vld [vmem:[#allocation8 + $0x1c] sm:$0xf]
    %v221 = vld [vmem:[#allocation8 + $0x20] sm:$0xf]
    %v222 = vld [vmem:[#allocation8 + $0x24] sm:$0xf]
    %v223 = vld [vmem:[#allocation8 + $0x28] sm:$0xf]
    %v224 = vld [vmem:[#allocation8 + $0x2c] sm:$0xf]
    %v225 = vld [vmem:[#allocation8 + $0x30] sm:$0xf]
    %v226 = vld [vmem:[#allocation8 + $0x34] sm:$0xf]
    %v227 = vld [vmem:[#allocation8 + $0x38] sm:$0xf]
    %v228 = vld [vmem:[#allocation8 + $0x3c] sm:$0xf]
    %v229 = vld [vmem:[#allocation8 + $0x40] sm:$0xf]
    %v230 = vld [vmem:[#allocation8 + $0x44] sm:$0xf]
    %v231 = vld [vmem:[#allocation8 + $0x48] sm:$0xf]
    %v232 = vld [vmem:[#allocation8 + $0x4c] sm:$0xf]
    %v233 = vld [vmem:[#allocation8 + $0x50] sm:$0xf]
    %v234 = vld [vmem:[#allocation8 + $0x54] sm:$0xf]
    %v235 = vld [vmem:[#allocation8 + $0x58] sm:$0xf]
    %v236 = vld [vmem:[#allocation8 + $0x5c] sm:$0xf]
    %v237 = vld [vmem:[#allocation8 + $0x60] sm:$0xf]
    %v238 = vld [vmem:[#allocation8 + $0x64] sm:$0xf]
    %v239 = vld [vmem:[#allocation8 + $0x68] sm:$0xf]
    %v240 = vld [vmem:[#allocation8 + $0x6c] sm:$0xf]
    %v241 = vld [vmem:[#allocation8 + $0x70] sm:$0xf]
    %v242 = vld [vmem:[#allocation8 + $0x74] sm:$0xf]
    %v243 = vld [vmem:[#allocation8 + $0x78] sm:$0xf]
    %v244 = vld [vmem:[#allocation8 + $0x7c] sm:$0xf]
    %v245 = vld [vmem:[#allocation8 + $0x80] sm:$0xf]
    %v246 = vld [vmem:[#allocation8 + $0x84] sm:$0xf]
    %v247 = vld [vmem:[#allocation8 + $0x88] sm:$0xf]
    %v248 = vld [vmem:[#allocation8 + $0x8c] sm:$0xf]
    %v249 = vld [vmem:[#allocation8 + $0x90] sm:$0xf]
    %v250 = vld [vmem:[#allocation8 + $0x94] sm:$0xf]
    %v251 = vld [vmem:[#allocation8 + $0x98] sm:$0xf]
    %v252 = vld [vmem:[#allocation8 + $0x9c] sm:$0xf]
    %v253 = vld [vmem:[#allocation8 + $0xa0] sm:$0xf]
    %v254 = vld [vmem:[#allocation8 + $0xa4] sm:$0xf]
    %v255 = vld [vmem:[#allocation8 + $0xa8] sm:$0xf]
    %v256 = vld [vmem:[#allocation8 + $0xac] sm:$0xf]
    %v257 = vld [vmem:[#allocation8 + $0xb0] sm:$0xf]
    %v258 = vld [vmem:[#allocation8 + $0xb4] sm:$0xf]
    %v259 = vld [vmem:[#allocation8 + $0xb8] sm:$0xf]
    %v260 = vld [vmem:[#allocation8 + $0xbc] sm:$0xf]
    %v261 = vld [vmem:[#allocation8 + $0xc0] sm:$0xf]
    %v262 = vld [vmem:[#allocation8 + $0xc4] sm:$0xf]
    %v263 = vld [vmem:[#allocation8 + $0xc8] sm:$0xf]
    %v264 = vld [vmem:[#allocation8 + $0xcc] sm:$0xf]
    %v265 = vld [vmem:[#allocation8 + $0xd0] sm:$0xf]
    %v266 = vld [vmem:[#allocation8 + $0xd4] sm:$0xf]
    %v267 = vld [vmem:[#allocation8 + $0xd8] sm:$0xf]
    %v268 = vld [vmem:[#allocation8 + $0xdc] sm:$0xf]
    %v269 = vld [vmem:[#allocation8 + $0xe0] sm:$0xf]
    %v270 = vld [vmem:[#allocation8 + $0xe4] sm:$0xf]
    %v271 = vld [vmem:[#allocation8 + $0xe8] sm:$0xf]
    %v272 = vld [vmem:[#allocation8 + $0xec] sm:$0xf]
    %v273 = vld [vmem:[#allocation8 + $0xf0] sm:$0xf]
    %v274 = vld [vmem:[#allocation8 + $0xf4] sm:$0xf]
    %v275 = vld [vmem:[#allocation8 + $0xf8] sm:$0xf]
    %v276 = vld [vmem:[#allocation8 + $0xfc] sm:$0xf]
    %v277 = vld [vmem:[%s4] sm:$0x1]
    %v279 = vlaneseq
    %v280 = vshrl.u32 %v279, 7
    %v281 = vsub.s32 0, %v280
    %v282 = vrot.slane %v277, %v281
    %v348 = vunpack.c.l.b16 %v213
    %v349 = vunpack.c.l.b16 %v214
    %v350 = vunpack.c.l.b16 %v215
    %v351 = vunpack.c.l.b16 %v216
    %v352 = vunpack.c.l.b16 %v217
    %v353 = vunpack.c.l.b16 %v218
    %v354 = vunpack.c.l.b16 %v219
    %v355 = vunpack.c.l.b16 %v220
    %v356 = vunpack.c.l.b16 %v221
    %v357 = vunpack.c.l.b16 %v222
    %v358 = vunpack.c.l.b16 %v223
    %v359 = vunpack.c.l.b16 %v224
    %v360 = vunpack.c.l.b16 %v225
    %v361 = vunpack.c.l.b16 %v226
    %v362 = vunpack.c.l.b16 %v227
    %v363 = vunpack.c.l.b16 %v228
    %v364 = vunpack.c.l.b16 %v229
    %v365 = vunpack.c.l.b16 %v230
    %v366 = vunpack.c.l.b16 %v231
    %v367 = vunpack.c.l.b16 %v232
    %v368 = vunpack.c.l.b16 %v233
    %v369 = vunpack.c.l.b16 %v234
    %v370 = vunpack.c.l.b16 %v235
    %v371 = vunpack.c.l.b16 %v236
    %v372 = vunpack.c.l.b16 %v237
    %v373 = vunpack.c.l.b16 %v238
    %v374 = vunpack.c.l.b16 %v239
    %v375 = vunpack.c.l.b16 %v240
    %v376 = vunpack.c.l.b16 %v241
    %v377 = vunpack.c.l.b16 %v242
    %v378 = vunpack.c.l.b16 %v243
    %v379 = vunpack.c.l.b16 %v244
    %v380 = vunpack.c.l.b16 %v245
    %v381 = vunpack.c.l.b16 %v246
    %v382 = vunpack.c.l.b16 %v247
    %v383 = vunpack.c.l.b16 %v248
    %v384 = vunpack.c.l.b16 %v249
    %v385 = vunpack.c.l.b16 %v250
    %v386 = vunpack.c.l.b16 %v251
    %v387 = vunpack.c.l.b16 %v252
    %v388 = vunpack.c.l.b16 %v253
    %v389 = vunpack.c.l.b16 %v254
    %v390 = vunpack.c.l.b16 %v255
    %v391 = vunpack.c.l.b16 %v256
    %v392 = vunpack.c.l.b16 %v257
    %v393 = vunpack.c.l.b16 %v258
    %v394 = vunpack.c.l.b16 %v259
    %v395 = vunpack.c.l.b16 %v260
    %v396 = vunpack.c.l.b16 %v261
    %v397 = vunpack.c.l.b16 %v262
    %v398 = vunpack.c.l.b16 %v263
    %v399 = vunpack.c.l.b16 %v264
    %v400 = vunpack.c.l.b16 %v265
    %v401 = vunpack.c.l.b16 %v266
    %v402 = vunpack.c.l.b16 %v267
    %v403 = vunpack.c.l.b16 %v268
    %v404 = vunpack.c.l.b16 %v269
    %v405 = vunpack.c.l.b16 %v270
    %v406 = vunpack.c.l.b16 %v271
    %v407 = vunpack.c.l.b16 %v272
    %v408 = vunpack.c.l.b16 %v273
    %v409 = vunpack.c.l.b16 %v274
    %v410 = vunpack.c.l.b16 %v275
    %v411 = vunpack.c.l.b16 %v276
    %v412 = vpack.c.b16 %v349, %v348
    %v413 = vpack.c.b16 %v351, %v350
    %v414 = vpack.c.b16 %v353, %v352
    %v415 = vpack.c.b16 %v355, %v354
    %v416 = vpack.c.b16 %v357, %v356
    %v417 = vpack.c.b16 %v359, %v358
    %v418 = vpack.c.b16 %v361, %v360
    %v419 = vpack.c.b16 %v363, %v362
    %v420 = vpack.c.b16 %v365, %v364
    %v421 = vpack.c.b16 %v367, %v366
    %v422 = vpack.c.b16 %v369, %v368
    %v423 = vpack.c.b16 %v371, %v370
    %v424 = vpack.c.b16 %v373, %v372
    %v425 = vpack.c.b16 %v375, %v374
    %v426 = vpack.c.b16 %v377, %v376
    %v427 = vpack.c.b16 %v379, %v378
    %v428 = vpack.c.b16 %v381, %v380
    %v429 = vpack.c.b16 %v383, %v382
    %v430 = vpack.c.b16 %v385, %v384
    %v431 = vpack.c.b16 %v387, %v386
    %v432 = vpack.c.b16 %v389, %v388
    %v433 = vpack.c.b16 %v391, %v390
    %v434 = vpack.c.b16 %v393, %v392
    %v435 = vpack.c.b16 %v395, %v394
    %v436 = vpack.c.b16 %v397, %v396
    %v437 = vpack.c.b16 %v399, %v398
    %v438 = vpack.c.b16 %v401, %v400
    %v439 = vpack.c.b16 %v403, %v402
    %v440 = vpack.c.b16 %v405, %v404
    %v441 = vpack.c.b16 %v407, %v406
    %v442 = vpack.c.b16 %v409, %v408
    %v443 = vpack.c.b16 %v411, %v410
    %476 = vmatprep.subr.bf16.mxu0 0
    %477 = vmatpush1.bf16.msra.mxu0 %v419
    %478 = vmatprep.subr.bf16.mxu0 0
    %479 = vmatpush1.bf16.msra.mxu0 %v418
    %480 = vmatprep.subr.bf16.mxu0 0
    %481 = vmatpush1.bf16.msra.mxu0 %v417
    %482 = vmatprep.subr.bf16.mxu0 0
    %483 = vmatpush1.bf16.msra.mxu0 %v416
    %484 = vmatprep.subr.bf16.mxu0 0
    %485 = vmatpush1.bf16.msra.mxu0 %v415
    %486 = vmatprep.subr.bf16.mxu0 0
    %487 = vmatpush1.bf16.msra.mxu0 %v414
    %488 = vmatprep.subr.bf16.mxu0 0
    %489 = vmatpush1.bf16.msra.mxu0 %v413
    %490 = vmatprep.subr.bf16.mxu0 0
    %491 = vmatpush1.bf16.msra.mxu0 %v412
    %492 = vmatprep.subr.bf16.mxu0 0
    %493 = vmatpush2.bf16.msra.mxu0 %v427
    %494 = vmatprep.subr.bf16.mxu0 0
    %495 = vmatpush2.bf16.msra.mxu0 %v426
    %496 = vmatprep.subr.bf16.mxu0 0
    %497 = vmatpush2.bf16.msra.mxu0 %v425
    %498 = vmatprep.subr.bf16.mxu0 0
    %499 = vmatpush2.bf16.msra.mxu0 %v424
    %500 = vmatprep.subr.bf16.mxu0 0
    %501 = vmatpush2.bf16.msra.mxu0 %v423
    %502 = vmatprep.subr.bf16.mxu0 0
    %503 = vmatpush2.bf16.msra.mxu0 %v422
    %504 = vmatprep.subr.bf16.mxu0 0
    %505 = vmatpush2.bf16.msra.mxu0 %v421
    %506 = vmatprep.subr.bf16.mxu0 0
    %507 = vmatpush2.bf16.msra.mxu0 %v420
    %508 = vmatprep.mubr.bf16.mxu0 %v210
    %509 = vmatmul.mubr.bf16.gmra.mxu0 %v209
    %v510 = vpop.f32.mrf.mxu0
    %v511 = vadd.f32 %v282, %v510
    %v512 = vpop.f32.mrf.mxu0
    %v513 = vpop.f32.mrf.mxu0
    %v514 = vpop.f32.mrf.mxu0
    %515 = vdwg.mxu0
    %516 = vmatprep.subr.bf16.mxu0 0
    %517 = vmatpush1.bf16.msra.mxu0 %v435
    %518 = vmatprep.subr.bf16.mxu0 0
    %519 = vmatpush1.bf16.msra.mxu0 %v434
    %520 = vmatprep.subr.bf16.mxu0 0
    %521 = vmatpush1.bf16.msra.mxu0 %v433
    %522 = vmatprep.subr.bf16.mxu0 0
    %523 = vmatpush1.bf16.msra.mxu0 %v432
    %524 = vmatprep.subr.bf16.mxu0 0
    %525 = vmatpush1.bf16.msra.mxu0 %v431
    %526 = vmatprep.subr.bf16.mxu0 0
    %527 = vmatpush1.bf16.msra.mxu0 %v430
    %528 = vmatprep.subr.bf16.mxu0 0
    %529 = vmatpush1.bf16.msra.mxu0 %v429
    %530 = vmatprep.subr.bf16.mxu0 0
    %531 = vmatpush1.bf16.msra.mxu0 %v428
    %532 = vmatprep.subr.bf16.mxu0 0
    %533 = vmatpush2.bf16.msra.mxu0 %v443
    %534 = vmatprep.subr.bf16.mxu0 0
    %535 = vmatpush2.bf16.msra.mxu0 %v442
    %536 = vmatprep.subr.bf16.mxu0 0
    %537 = vmatpush2.bf16.msra.mxu0 %v441
    %538 = vmatprep.subr.bf16.mxu0 0
    %539 = vmatpush2.bf16.msra.mxu0 %v440
    %540 = vmatprep.subr.bf16.mxu0 0
    %541 = vmatpush2.bf16.msra.mxu0 %v439
    %542 = vmatprep.subr.bf16.mxu0 0
    %543 = vmatpush2.bf16.msra.mxu0 %v438
    %544 = vmatprep.subr.bf16.mxu0 0
    %545 = vmatpush2.bf16.msra.mxu0 %v437
    %546 = vmatprep.subr.bf16.mxu0 0
    %547 = vmatpush2.bf16.msra.mxu0 %v436
    %548 = vmatprep.mubr.bf16.mxu0 %v212
    %549 = vmatmul.mubr.bf16.gmra.mxu0 %v211
    %v550 = vpop.f32.mrf.mxu0
    %v551 = vadd.f32 %v511, %v550
    %v552 = vpop.f32.mrf.mxu0
    %v553 = vpop.f32.mrf.mxu0
    %v554 = vpop.f32.mrf.mxu0
    %555 = vdwg.mxu0
    %556 = vst [vmem:[#allocation10] sm:$0xff] %v551
    // Predicated region
    $region38: #{tpu_custom_call.1} parent=1 // pred_check
      _
    $region39: #{tpu_custom_call.1} parent=1 // pred_check_branch
      %558 = sbr.rel (0) target = $region41
    $region40: #{tpu_custom_call.1} parent=1 // pred_region
      %s560 = ssub.s32 128, 128
      %561 = vsyncadd [#allocation4], %s560
      %s563 = sshll.u32 [#allocation10], 4
      %s564 = int_to_ptr.vmem [resolvable:$true] %s563
      %566 = dma.vmem_to_hbm [thread:$0]  %s564, 128, %s5, [#allocation4]
    $region41: #{tpu_custom_call.1} parent=1 // pred_fallthru
      _
    // Predicated region
    $region42: #{tpu_custom_call.1} parent=1 // pred_check
      _
    $region43: #{tpu_custom_call.1} parent=1 // pred_check_branch
      %568 = sbr.rel (0) target = $region45
    $region44: #{tpu_custom_call.1} parent=1 // pred_region
      %569 = dma.done [#allocation4], 128
    $region45: #{tpu_custom_call.1} parent=1 // pred_fallthru
      _
    %570 = vsyncpa [#allocation3], 1
    %571 = vsyncpa [#allocation6], 1
    %572 = vsyncpa [#allocation9], 1
    %573 = vsyncpa [#allocation4], 1

</llo_original>
